<compile_context>
chip_gen: v7x
topology: tpu7x:2x2x1
jax: 0.10.0
libtpu: 0.0.40
codegen_flags: <defaults>
</compile_context>

<pallas_src>
import functools
from types import SimpleNamespace

import jax
import jax.numpy as jnp
from jax.experimental import pallas as pl
from jax.experimental.pallas import tpu as pltpu

_LANES = 128


def _round_up(x, m):
    return (x + m - 1) // m * m


def _vmem_budgets():
    """(scoped vmem_limit_bytes, A-stream double-buffer budget) per generation."""
    cap = 64 * 1024 * 1024                       # conservative default (v7x per-TC)
    try:
        cap = int(getattr(pltpu.get_tpu_info(), "vmem_capacity_bytes", cap))
    except Exception:
        pass
    if cap >= 100 * 1024 * 1024:                 # v5e / v6e: 128 MiB VMEM
        return 100 * 1024 * 1024, 48 * 1024 * 1024
    return 48 * 1024 * 1024, 24 * 1024 * 1024    # v7x (64 MiB / TC) or unknown


def _choose_tiles(n_pad, a_budget_bytes):
    """Row tile TN and column (contraction) tile TK for the A-streaming kernel."""
    # Row tile: largest of 512/256/128/64 that divides n_pad and keeps the
    # "parallel" row axis length >= 2 (dual-TC split on v7x).
    tn = 512
    while tn > 64 and (n_pad % tn != 0 or tn > n_pad // 2):
        tn //= 2
    # Column tile: largest of 2048..128 dividing n_pad whose double-buffered
    # bf16 A tile stays within the per-generation stream budget.
    tk = 2048
    while tk > 128 and (n_pad % tk != 0 or 2 * tn * tk * 2 > a_budget_bytes):
        tk //= 2
    return tn, tk


# ---------------------------------------------------------------------------
# Kernels
# ---------------------------------------------------------------------------
def _sage_prematmul_kernel(h_ref, wl_ref, wr_ref, b_ref, hwl_ref, hwrb_ref):
    """Per row tile: hWl = h @ Wl (bf16 out), hWrb = h @ Wr + b (f32 out)."""
    f32 = jnp.float32
    h = h_ref[...].astype(jnp.bfloat16)
    hwl = jnp.dot(h, wl_ref[...], preferred_element_type=f32)
    hwr = jnp.dot(h, wr_ref[...], preferred_element_type=f32)
    hwl_ref[...] = hwl.astype(hwl_ref.dtype)
    hwrb_ref[...] = hwr + b_ref[...]


def _sage_aggr_kernel(a_ref, hwl_ref, hwrb_ref, rs_ref, out_ref, acc_ref, *, normalize):
    """Row tile i, K tile k:  acc += A[i,k] @ hWl[k];  finalize at k==last."""
    k = pl.program_id(1)

    @pl.when(k == 0)
    def _():
        acc_ref[...] = jnp.zeros_like(acc_ref)

    acc_ref[...] += jnp.dot(a_ref[...], hwl_ref[...],
                            preferred_element_type=jnp.float32)

    @pl.when(k == pl.num_programs(1) - 1)
    def _():
        out = acc_ref[...] * rs_ref[...] + hwrb_ref[...]   # f32 VPU epilogue
        if normalize:                                      # F.normalize(p=2, dim=-1)
            norm = jnp.sqrt(jnp.sum(out * out, axis=-1, keepdims=True))
            out = out / jnp.maximum(norm, 1e-12)
        out_ref[...] = out.astype(out_ref.dtype)           # bf16 inter-layer h


def _pool_mlp_kernel(pool_ref, h_ref, wmlp_ref, bmlp_ref, wout_ref, bout_ref, out_ref):
    """global_add_pool -> 4x(Linear+ReLU) -> Linear(1) (output padded to 128 lanes)."""
    f32 = jnp.float32
    g = jnp.dot(pool_ref[...], h_ref[...], preferred_element_type=f32)   # [G_pad, H]
    for i in range(4):
        g = jnp.maximum(
            jnp.dot(g.astype(jnp.bfloat16), wmlp_ref[i],
                    preferred_element_type=f32) + bmlp_ref[i],
            0.0,
        )
    out_ref[...] = (jnp.dot(g.astype(jnp.bfloat16), wout_ref[...],
                            preferred_element_type=f32) + bout_ref[...])


# ---------------------------------------------------------------------------
# pallas_call wrappers
# ---------------------------------------------------------------------------
def _sage_prematmul(h_prev, wl_bf16, wr_bf16, bias, *, tile_rows, vmem_limit):
    n_pad, h_in = h_prev.shape
    hidden = wl_bf16.shape[1]
    return pl.pallas_call(
        _sage_prematmul_kernel,
        out_shape=(jax.ShapeDtypeStruct((n_pad, hidden), jnp.bfloat16),
                   jax.ShapeDtypeStruct((n_pad, hidden), jnp.float32)),
        grid_spec=pltpu.PrefetchScalarGridSpec(
            num_scalar_prefetch=0,
            grid=(n_pad // tile_rows,),
            in_specs=[
                pl.BlockSpec((tile_rows, h_in), lambda i: (i, 0)),   # h row tile
                pl.BlockSpec((h_in, hidden), lambda i: (0, 0)),      # Wl (bf16)
                pl.BlockSpec((h_in, hidden), lambda i: (0, 0)),      # Wr (bf16)
                pl.BlockSpec((1, hidden), lambda i: (0, 0)),         # lin_l bias (f32)
            ],
            out_specs=[pl.BlockSpec((tile_rows, hidden), lambda i: (i, 0)),
                       pl.BlockSpec((tile_rows, hidden), lambda i: (i, 0))],
        ),
        compiler_params=pltpu.CompilerParams(
            dimension_semantics=("parallel",),
            vmem_limit_bytes=vmem_limit,
        ),
    )(h_prev, wl_bf16, wr_bf16, bias)


def _sage_aggr(a_bf16, hwl, hwrb, rscale, *, tn, tk, normalize, vmem_limit):
    n_pad = a_bf16.shape[0]
    hidden = hwl.shape[1]
    kernel = functools.partial(_sage_aggr_kernel, normalize=normalize)
    return pl.pallas_call(
        kernel,
        out_shape=jax.ShapeDtypeStruct((n_pad, hidden), jnp.bfloat16),
        grid_spec=pltpu.PrefetchScalarGridSpec(
            num_scalar_prefetch=0,
            grid=(n_pad // tn, n_pad // tk),
            in_specs=[
                pl.BlockSpec((tn, tk), lambda i, k: (i, k)),       # A tile (bf16, streamed)
                pl.BlockSpec((tk, hidden), lambda i, k: (k, 0)),   # hWl K block (bf16)
                pl.BlockSpec((tn, hidden), lambda i, k: (i, 0)),   # hWr + b rows (f32)
                pl.BlockSpec((tn, 1), lambda i, k: (i, 0)),        # 1/deg rows (f32)
            ],
            out_specs=pl.BlockSpec((tn, hidden), lambda i, k: (i, 0)),
            scratch_shapes=[pltpu.VMEM((tn, hidden), jnp.float32)],
        ),
        compiler_params=pltpu.CompilerParams(
            dimension_semantics=("parallel", "arbitrary"),   # megacore rows, K reduction
            vmem_limit_bytes=vmem_limit,
        ),
    )(a_bf16, hwl, hwrb, rscale)


def _pool_mlp(pool_bf16, h3, wmlp, bmlp, wout_pad, bout_pad, *, vmem_limit):
    g_pad = pool_bf16.shape[0]
    vmem = pl.BlockSpec(memory_space=pltpu.MemorySpace.VMEM)
    return pl.pallas_call(
        _pool_mlp_kernel,
        out_shape=jax.ShapeDtypeStruct((g_pad, _LANES), jnp.float32),
        in_specs=[vmem] * 6,
        out_specs=vmem,
        compiler_params=pltpu.CompilerParams(vmem_limit_bytes=vmem_limit),
    )(pool_bf16, h3, wmlp, bmlp, wout_pad, bout_pad)


# ---------------------------------------------------------------------------
# plain-JAX glue
# ---------------------------------------------------------------------------
def _aggr_operands(edge_index, n_pad, aggr):
    """Binary bf16 adjacency (edge counts, exact <=256 dups) + f32 per-row scale."""
    src = edge_index[0].astype(jnp.int32)
    dst = edge_index[1].astype(jnp.int32)
    a = jnp.zeros((n_pad, n_pad), jnp.bfloat16).at[dst, src].add(
        jnp.ones(src.shape, jnp.bfloat16))
    if aggr == "mean":
        deg = jnp.zeros((n_pad,), jnp.float32).at[dst].add(1.0)
        rscale = (1.0 / jnp.maximum(deg, 1.0))[:, None]   # empty neighborhood -> /1 (PyG)
    elif aggr == "add":
        rscale = jnp.ones((n_pad, 1), jnp.float32)
    else:
        raise ValueError(f"unsupported aggr: {aggr}")
    return a, rscale


def init_value_net_params(key, n_node_features, hidden):
    """Deterministic synthetic parameters (shapes match the PyTorch module)."""
    ks = jax.random.split(key, 16)

    def w(k, i, o):
        return (jax.random.normal(k, (i, o), jnp.float32) / jnp.sqrt(i)).astype(jnp.float32)

    return dict(
        wl1=w(ks[0], n_node_features, hidden), bl1=jnp.zeros((1, hidden), jnp.float32),
        wr1=w(ks[1], n_node_features, hidden),
        wl2=w(ks[2], hidden, hidden), bl2=jnp.zeros((1, hidden), jnp.float32),
        wr2=w(ks[3], hidden, hidden),
        wl3=w(ks[4], hidden, hidden), bl3=jnp.zeros((1, hidden), jnp.float32),
        wr3=w(ks[5], hidden, hidden),
        wmlp=jnp.stack([w(ks[6 + i], hidden, hidden) for i in range(4)]),
        bmlp=jnp.stack([0.01 * jnp.ones((1, hidden), jnp.float32) for _ in range(4)]),
        wout=w(ks[10], hidden, 1), bout=jnp.zeros((1, 1), jnp.float32),
    )


def value_net_forward(params, x, eic, eid, eit, batch, num_graphs, config):
    n_nodes, f_in = x.shape
    hidden = config.hidden_neurons
    vmem_limit, a_budget = _vmem_budgets()
    n_pad = _round_up(max(n_nodes, 1), _LANES)
    tn, tk = _choose_tiles(n_pad, a_budget)
    g_pad = _round_up(max(num_graphs, 1), 8)

    # node features, zero-padded to the lane-aligned node count
    h0 = jnp.zeros((n_pad, f_in), jnp.float32).at[:n_nodes].set(x.astype(jnp.float32))

    # bf16 binary aggregation matrices + f32 row scales (mean = 1/deg)
    a_it, rs_it = _aggr_operands(eit, n_pad, config.aggr_con)
    a_ic, rs_ic = _aggr_operands(eic, n_pad, config.aggr_con)
    a_id, rs_id = _aggr_operands(eid, n_pad, config.aggr_dest)

    # global_add_pool selector (binary -> bf16-exact)
    sel = (batch[None, :] == jnp.arange(g_pad, dtype=batch.dtype)[:, None])
    pool = jnp.zeros((g_pad, n_pad), jnp.bfloat16).at[:, :n_nodes].set(sel.astype(jnp.bfloat16))

    bf16 = jnp.bfloat16

    def sage(h, a, rs, wl, wr, b, normalize):
        hwl, hwrb = _sage_prematmul(h, wl.astype(bf16), wr.astype(bf16), b,
                                    tile_rows=tn, vmem_limit=vmem_limit)
        return _sage_aggr(a, hwl, hwrb, rs, tn=tn, tk=tk,
                          normalize=normalize, vmem_limit=vmem_limit)

    h1 = sage(h0, a_it, rs_it, params["wl1"], params["wr1"], params["bl1"],
              config.normalize)                                   # conv1(x, eit)
    h2 = sage(h1, a_ic, rs_ic, params["wl2"], params["wr2"], params["bl2"],
              config.normalize)                                   # conv2(x, eic)
    h3 = sage(h2, a_id, rs_id, params["wl3"], params["wr3"], params["bl3"],
              False)                                              # conv3(x, eid)

    # lane-dense head: pad the 1-wide output to 128 lanes, slice outside
    wout_pad = jnp.zeros((hidden, _LANES), jnp.float32).at[:, :1].set(params["wout"]).astype(bf16)
    bout_pad = jnp.zeros((1, _LANES), jnp.float32).at[:, :1].set(params["bout"])

    out = _pool_mlp(pool, h3, params["wmlp"].astype(bf16), params["bmlp"],
                    wout_pad, bout_pad, vmem_limit=vmem_limit)
    return out[:num_graphs, :1]


# ---------------------------------------------------------------------------
# pure-JAX f32 reference (mirrors the PyTorch forward)
# ---------------------------------------------------------------------------
def _reference_forward(params, x, eic, eid, eit, batch, num_graphs, config):
    n = x.shape[0]

    def sage(h, ei, wl, bl, wr, aggr, norm):
        a = jnp.zeros((n, n), jnp.float32).at[ei[1], ei[0]].add(1.0)
        m = a @ h
        if aggr == "mean":
            m = m / jnp.maximum(jnp.sum(a, axis=1, keepdims=True), 1.0)
        out = m @ wl + bl + h @ wr
        if norm:
            out = out / jnp.maximum(
                jnp.sqrt(jnp.sum(out * out, axis=-1, keepdims=True)), 1e-12)
        return out

    h = sage(x.astype(jnp.float32), eit, params["wl1"], params["bl1"], params["wr1"],
             config.aggr_con, config.normalize)
    h = sage(h, eic, params["wl2"], params["bl2"], params["wr2"],
             config.aggr_con, config.normalize)
    h = sage(h, eid, params["wl3"], params["bl3"], params["wr3"],
             config.aggr_dest, False)
    pool = (batch[None, :] == jnp.arange(num_graphs)[:, None]).astype(jnp.float32)
    g = pool @ h
    for i in range(4):
        g = jnp.maximum(g @ params["wmlp"][i] + params["bmlp"][i], 0.0)
    return g @ params["wout"] + params["bout"]


if __name__ == "__main__":
    config = SimpleNamespace(
        hidden_neurons=32,
        n_node_features=4,
        normalize=False,
        aggr_con="mean",
        aggr_dest="add",
    )

    key = jax.random.PRNGKey(0)
    k_param, k_x, k_e1, k_e2, k_e3 = jax.random.split(key, 5)

    n_nodes, n_edges, n_graphs = 8, 16, 2
    x = jax.random.normal(k_x, (n_nodes, config.n_node_features), jnp.float32)
    eit = jax.random.randint(k_e1, (2, n_edges), 0, n_nodes, jnp.int32)
    eic = jax.random.randint(k_e2, (2, n_edges), 0, n_nodes, jnp.int32)
    eid = jax.random.randint(k_e3, (2, n_edges), 0, n_nodes, jnp.int32)
    batch = jnp.array([0, 0, 0, 0, 1, 1, 1, 1], jnp.int32)

    params = init_value_net_params(k_param, config.n_node_features, config.hidden_neurons)

    out = value_net_forward(params, x, eic, eid, eit, batch, n_graphs, config)
    out = jax.block_until_ready(out)
    assert out.shape == (n_graphs, 1)

    ref = _reference_forward(params, x, eic, eid, eit, batch, n_graphs, config)
    max_err = float(jnp.max(jnp.abs(out - ref)))
    tol = 5e-2 * (float(jnp.max(jnp.abs(ref))) + 1.0)   # bf16 matmul operands, f32 accum
    assert max_err <= tol, (max_err, tol)

    print("KERNEL_OK")
</pallas_src>

<mosaic_0001>
module attributes {stable_mosaic.version = 11 : i64} {
  func.func @_sage_prematmul_kernel(%arg0: i32, %arg1: memref<64x4xf32, #tpu.memory_space<vmem>>, %arg2: memref<4x32xbf16, #tpu.memory_space<vmem>>, %arg3: memref<4x32xbf16, #tpu.memory_space<vmem>>, %arg4: memref<1x32xf32, #tpu.memory_space<vmem>>, %arg5: memref<64x32xbf16, #tpu.memory_space<vmem>>, %arg6: memref<64x32xf32, #tpu.memory_space<vmem>>) attributes {dimension_semantics = [#tpu.dimension_semantics<parallel>], iteration_bounds = array<i64: 2>, scalar_prefetch = 0 : i64, scratch_operands = 0 : i64, tpu.core_type = #tpu.core_type<tc>, window_params = [{transform_indices = @transform_0, window_bounds = array<i64: 64, 4>}, {pipeline_mode = #tpu.pipeline_mode<synchronous>, transform_indices = @transform_1, window_bounds = array<i64: 4, 32>}, {pipeline_mode = #tpu.pipeline_mode<synchronous>, transform_indices = @transform_2, window_bounds = array<i64: 4, 32>}, {pipeline_mode = #tpu.pipeline_mode<synchronous>, transform_indices = @transform_3, window_bounds = array<i64: 1, 32>}, {transform_indices = @transform_4, window_bounds = array<i64: 64, 32>}, {transform_indices = @transform_5, window_bounds = array<i64: 64, 32>}]} {
    %c0 = arith.constant 0 : index
    %c0_0 = arith.constant 0 : index
    %0 = vector.load %arg1[%c0, %c0_0] : memref<64x4xf32, #tpu.memory_space<vmem>>, vector<64x4xf32>
    %1 = arith.truncf %0 : vector<64x4xf32> to vector<64x4xbf16>
    %c0_1 = arith.constant 0 : index
    %c0_2 = arith.constant 0 : index
    %2 = vector.load %arg2[%c0_1, %c0_2] : memref<4x32xbf16, #tpu.memory_space<vmem>>, vector<4x32xbf16>
    %cst = arith.constant dense<0.000000e+00> : vector<64x32xf32>
    %3 = tpu.matmul %1, %2, %cst {dimension_numbers = #tpu.dot_dimension_numbers<[1], [0], [0], [1], [0, 0, 1, 1], [], []>} : vector<64x4xbf16>, vector<4x32xbf16>, vector<64x32xf32> -> vector<64x32xf32>
    %c0_3 = arith.constant 0 : index
    %c0_4 = arith.constant 0 : index
    %4 = vector.load %arg3[%c0_3, %c0_4] : memref<4x32xbf16, #tpu.memory_space<vmem>>, vector<4x32xbf16>
    %cst_5 = arith.constant dense<0.000000e+00> : vector<64x32xf32>
    %5 = tpu.matmul %1, %4, %cst_5 {dimension_numbers = #tpu.dot_dimension_numbers<[1], [0], [0], [1], [0, 0, 1, 1], [], []>} : vector<64x4xbf16>, vector<4x32xbf16>, vector<64x32xf32> -> vector<64x32xf32>
    %6 = arith.truncf %3 : vector<64x32xf32> to vector<64x32xbf16>
    %c0_6 = arith.constant 0 : index
    %c0_7 = arith.constant 0 : index
    %7 = vector.load %arg5[%c0_6, %c0_7] : memref<64x32xbf16, #tpu.memory_space<vmem>>, vector<64x32xbf16>
    tpu.vector_store %arg5[%c0_6, %c0_7], %6 {strides = array<i32>} : memref<64x32xbf16, #tpu.memory_space<vmem>>, vector<64x32xbf16>,
    %c0_8 = arith.constant 0 : index
    %c0_9 = arith.constant 0 : index
    %8 = vector.load %arg4[%c0_8, %c0_9] : memref<1x32xf32, #tpu.memory_space<vmem>>, vector<1x32xf32>
    %9 = vector.broadcast %8 : vector<1x32xf32> to vector<64x32xf32>
    %10 = arith.addf %5, %9 : vector<64x32xf32>
    %c0_10 = arith.constant 0 : index
    %c0_11 = arith.constant 0 : index
    %11 = vector.load %arg6[%c0_10, %c0_11] : memref<64x32xf32, #tpu.memory_space<vmem>>, vector<64x32xf32>
    tpu.vector_store %arg6[%c0_10, %c0_11], %10 {strides = array<i32>} : memref<64x32xf32, #tpu.memory_space<vmem>>, vector<64x32xf32>,
    return
  }
  func.func @transform_0(%arg0: i32) -> (i32, i32) {
    %c0_i32 = arith.constant 0 : i32
    %c0_i32_0 = arith.constant 0 : i32
    return %arg0, %c0_i32 : i32, i32
  }
  func.func @transform_1(%arg0: i32) -> (i32, i32) {
    %c0_i32 = arith.constant 0 : i32
    %c0_i32_0 = arith.constant 0 : i32
    %c0_i32_1 = arith.constant 0 : i32
    return %c0_i32, %c0_i32_0 : i32, i32
  }
  func.func @transform_2(%arg0: i32) -> (i32, i32) {
    %c0_i32 = arith.constant 0 : i32
    %c0_i32_0 = arith.constant 0 : i32
    %c0_i32_1 = arith.constant 0 : i32
    return %c0_i32, %c0_i32_0 : i32, i32
  }
  func.func @transform_3(%arg0: i32) -> (i32, i32) {
    %c0_i32 = arith.constant 0 : i32
    %c0_i32_0 = arith.constant 0 : i32
    %c0_i32_1 = arith.constant 0 : i32
    return %c0_i32, %c0_i32_0 : i32, i32
  }
  func.func @transform_4(%arg0: i32) -> (i32, i32) {
    %c0_i32 = arith.constant 0 : i32
    %c0_i32_0 = arith.constant 0 : i32
    return %arg0, %c0_i32 : i32, i32
  }
  func.func @transform_5(%arg0: i32) -> (i32, i32) {
    %c0_i32 = arith.constant 0 : i32
    %c0_i32_0 = arith.constant 0 : i32
    return %arg0, %c0_i32 : i32, i32
  }
}

</mosaic_0001>

<llo_original>
// kernel: tpu_custom_call.1
$region0: #{tpu_custom_call.1}
  #allocation0 [shape = 'u32[]', space=smem, size = 0x4, offset = 0x4, fixed_abs, tag = 'smem constant byte address 0x4 - core index']
  #allocation1 [shape = 'u32[144,128]{1,0:T(1,128)}', space=vmem, size = 0x12000, scoped, tag = 'internal scratch']
  %s0 = inlined_call_operand.vmem [shape: f32[128,4], index: 0, kind: input, shape index: {}]
  %s1 = inlined_call_operand.vmem [shape: bf16[4,32], index: 1, kind: input, shape index: {}]
  %s2 = inlined_call_operand.vmem [shape: bf16[4,32], index: 2, kind: input, shape index: {}]
  %s3 = inlined_call_operand.vmem [shape: f32[1,32], index: 3, kind: input, shape index: {}]
  %s4 = inlined_call_operand.vmem [shape: bf16[128,32], index: 4, kind: output, shape index: {0}]
  %s5 = inlined_call_operand.vmem [shape: f32[128,32], index: 5, kind: output, shape index: {1}]
  %6 = xla_tuple %s4, %s5
  %s7 = sld [smem:[#allocation0]]
  $region57: #{tpu_custom_call.1} parent=0
    _
  %s9 = ssub.s32 1, %s7
  %s10 = scalar_select 0, %s9, %s7
  loop: start=0, step=1, limit=4
  $region2: #{tpu_custom_call.1} parent=0 // loop_pre_header
    _
  $region3: #{tpu_custom_call.1} parent=0 // loop_header
    %s12 = sphi 0, %s16
    %p13 = scmp.ge.s32.totalorder %s12, 4
    %s22 = sphi 0, %s24
    %s25 = sphi 0, %s22
    %s26 = sphi 0, %s25
    %s42 = sphi 0, %s26
    %s46 = sphi 0, %s46
    %s48 = sphi 0, %s46
    %s49 = sphi 0, %s48
    %s63 = sphi 0, %s49
    %s67 = sphi 0, %s67
    %s69 = sphi 0, %s67
    %s70 = sphi 0, %s69
    %s84 = sphi 0, %s70
    %s88 = sphi 0, %s88
    %s90 = sphi 0, %s88
    %s91 = sphi 0, %s90
    %s105 = sphi 0, %s91
    %s111 = sphi 0, %s113
    %s114 = sphi 0, %s111
    %s115 = sphi 0, %s114
    %s131 = sphi 0, %s115
    %s137 = sphi 0, %s139
    %s140 = sphi 0, %s137
    %s141 = sphi 0, %s140
    %s157 = sphi 0, %s141
  $region4: #{tpu_custom_call.1} parent=0 // loop_header_branch
    %15 = sbr.rel (%p13) target = $region8
  $region5: #{tpu_custom_call.1} parent=0 // loop_body
    %s17 = ssub.s32 %s12, 1
    %s18 = ssub.s32 %s12, 2
    %s19 = sadd.s32 %s12, 1
    %s20 = ssub.s32 %s12, %s19
    %p21 = scmp.eq.s32.totalorder %s20, 0
    %s23 = sadd.s32 %s22, 1
    %s24 = scalar_select %p21, %s22, %s23
    %p27 = pneg %p21
    %p28 = scmp.eq.s32.totalorder %s12, 1
    %p29 = por %p27, %p28
    %p30 = scmp.ne.s32.totalorder %s22, %s25
    %p31 = scmp.eq.s32.totalorder %s12, 0
    %p32 = por %p30, %p31
    %p33 = scmp.ne.s32.totalorder %s22, %s25
    %p34 = scmp.eq.s32.totalorder %s17, 1
    %p35 = por %p33, %p34
    %p36 = scmp.ne.s32.totalorder %s25, %s26
    %p37 = scmp.eq.s32.totalorder %s17, 0
    %p38 = por %p36, %p37
    %p39 = scmp.ne.s32.totalorder %s25, %s26
    %p40 = scmp.eq.s32.totalorder %s18, 1
    %p41 = por %p39, %p40
    %p43 = scmp.ne.s32.totalorder %s26, %s42
    %p44 = scmp.eq.s32.totalorder %s18, 0
    %p45 = por %p43, %p44
    %s47 = sadd.s32 %s46, 1
    %p50 = scmp.eq.s32.totalorder %s12, 1
    %p51 = scmp.ne.s32.totalorder %s46, %s48
    %p52 = scmp.eq.s32.totalorder %s12, 0
    %p53 = por %p51, %p52
    %p54 = scmp.ne.s32.totalorder %s46, %s48
    %p55 = scmp.eq.s32.totalorder %s17, 1
    %p56 = por %p54, %p55
    %p57 = scmp.ne.s32.totalorder %s48, %s49
    %p58 = scmp.eq.s32.totalorder %s17, 0
    %p59 = por %p57, %p58
    %p60 = scmp.ne.s32.totalorder %s48, %s49
    %p61 = scmp.eq.s32.totalorder %s18, 1
    %p62 = por %p60, %p61
    %p64 = scmp.ne.s32.totalorder %s49, %s63
    %p65 = scmp.eq.s32.totalorder %s18, 0
    %p66 = por %p64, %p65
    %s68 = sadd.s32 %s67, 1
    %p71 = scmp.eq.s32.totalorder %s12, 1
    %p72 = scmp.ne.s32.totalorder %s67, %s69
    %p73 = scmp.eq.s32.totalorder %s12, 0
    %p74 = por %p72, %p73
    %p75 = scmp.ne.s32.totalorder %s67, %s69
    %p76 = scmp.eq.s32.totalorder %s17, 1
    %p77 = por %p75, %p76
    %p78 = scmp.ne.s32.totalorder %s69, %s70
    %p79 = scmp.eq.s32.totalorder %s17, 0
    %p80 = por %p78, %p79
    %p81 = scmp.ne.s32.totalorder %s69, %s70
    %p82 = scmp.eq.s32.totalorder %s18, 1
    %p83 = por %p81, %p82
    %p85 = scmp.ne.s32.totalorder %s70, %s84
    %p86 = scmp.eq.s32.totalorder %s18, 0
    %p87 = por %p85, %p86
    %s89 = sadd.s32 %s88, 1
    %p92 = scmp.eq.s32.totalorder %s12, 1
    %p93 = scmp.ne.s32.totalorder %s88, %s90
    %p94 = scmp.eq.s32.totalorder %s12, 0
    %p95 = por %p93, %p94
    %p96 = scmp.ne.s32.totalorder %s88, %s90
    %p97 = scmp.eq.s32.totalorder %s17, 1
    %p98 = por %p96, %p97
    %p99 = scmp.ne.s32.totalorder %s90, %s91
    %p100 = scmp.eq.s32.totalorder %s17, 0
    %p101 = por %p99, %p100
    %p102 = scmp.ne.s32.totalorder %s90, %s91
    %p103 = scmp.eq.s32.totalorder %s18, 1
    %p104 = por %p102, %p103
    %p106 = scmp.ne.s32.totalorder %s91, %s105
    %p107 = scmp.eq.s32.totalorder %s18, 0
    %p108 = por %p106, %p107
    %s109 = ssub.s32 %s12, %s19
    %p110 = scmp.eq.s32.totalorder %s109, 0
    %s112 = sadd.s32 %s111, 1
    %s113 = scalar_select %p110, %s111, %s112
    %p116 = pneg %p110
    %p117 = scmp.eq.s32.totalorder %s12, 1
    %p118 = por %p116, %p117
    %p119 = scmp.ne.s32.totalorder %s111, %s114
    %p120 = scmp.eq.s32.totalorder %s12, 0
    %p121 = por %p119, %p120
    %p122 = scmp.ne.s32.totalorder %s111, %s114
    %p123 = scmp.eq.s32.totalorder %s17, 1
    %p124 = por %p122, %p123
    %p125 = scmp.ne.s32.totalorder %s114, %s115
    %p126 = scmp.eq.s32.totalorder %s17, 0
    %p127 = por %p125, %p126
    %p128 = scmp.ne.s32.totalorder %s114, %s115
    %p129 = scmp.eq.s32.totalorder %s18, 1
    %p130 = por %p128, %p129
    %p132 = scmp.ne.s32.totalorder %s115, %s131
    %p133 = scmp.eq.s32.totalorder %s18, 0
    %p134 = por %p132, %p133
    %s135 = ssub.s32 %s12, %s19
    %p136 = scmp.eq.s32.totalorder %s135, 0
    %s138 = sadd.s32 %s137, 1
    %s139 = scalar_select %p136, %s137, %s138
    %p142 = pneg %p136
    %p143 = scmp.eq.s32.totalorder %s12, 1
    %p144 = por %p142, %p143
    %p145 = scmp.ne.s32.totalorder %s137, %s140
    %p146 = scmp.eq.s32.totalorder %s12, 0
    %p147 = por %p145, %p146
    %p148 = scmp.ne.s32.totalorder %s137, %s140
    %p149 = scmp.eq.s32.totalorder %s17, 1
    %p150 = por %p148, %p149
    %p151 = scmp.ne.s32.totalorder %s140, %s141
    %p152 = scmp.eq.s32.totalorder %s17, 0
    %p153 = por %p151, %p152
    %p154 = scmp.ne.s32.totalorder %s140, %s141
    %p155 = scmp.eq.s32.totalorder %s18, 1
    %p156 = por %p154, %p155
    %p158 = scmp.ne.s32.totalorder %s141, %s157
    %p159 = scmp.eq.s32.totalorder %s18, 0
    %p160 = por %p158, %p159
    %p161 = scmp.le.s32.totalorder 1, %s12
    %p162 = scmp.lt.s32.totalorder %s12, 3
    %p163 = pnand %p161, %p162
    %p164 = pneg %p163
    // Predicated region
    $region9: #{tpu_custom_call.1} parent=5 // pred_check
      _
    $region10: #{tpu_custom_call.1} parent=5 // pred_check_branch
      %166 = sbr.rel (%p163) target = $region12
    $region11: #{tpu_custom_call.1} parent=5 // pred_region
      %s167 = ssub.s32 %s12, 1
      // Predicated region
      $region13: #{tpu_custom_call.1} parent=11 // pred_check
        %p168 = pneg %p59
      $region14: #{tpu_custom_call.1} parent=11 // pred_check_branch
        %170 = sbr.rel (%p168) target = $region16
      $region15: #{tpu_custom_call.1} parent=11 // pred_region
        _
      $region16: #{tpu_custom_call.1} parent=11 // pred_fallthru
        _
      // Predicated region
      $region17: #{tpu_custom_call.1} parent=11 // pred_check
        %p171 = pneg %p80
      $region18: #{tpu_custom_call.1} parent=11 // pred_check_branch
        %173 = sbr.rel (%p171) target = $region20
      $region19: #{tpu_custom_call.1} parent=11 // pred_region
        _
      $region20: #{tpu_custom_call.1} parent=11 // pred_fallthru
        _
      // Predicated region
      $region21: #{tpu_custom_call.1} parent=11 // pred_check
        %p174 = pneg %p101
      $region22: #{tpu_custom_call.1} parent=11 // pred_check_branch
        %176 = sbr.rel (%p174) target = $region24
      $region23: #{tpu_custom_call.1} parent=11 // pred_region
        _
      $region24: #{tpu_custom_call.1} parent=11 // pred_fallthru
        _
    $region12: #{tpu_custom_call.1} parent=5 // pred_fallthru
      _
    %p177 = scmp.lt.s32.totalorder %s12, 2
    // Predicated region
    $region25: #{tpu_custom_call.1} parent=5 // pred_check
      %p178 = pneg %p177
    $region26: #{tpu_custom_call.1} parent=5 // pred_check_branch
      %180 = sbr.rel (%p178) target = $region28
    $region27: #{tpu_custom_call.1} parent=5 // pred_region
      // Predicated region
      $region29: #{tpu_custom_call.1} parent=27 // pred_check
        %p181 = pneg %p32
      $region30: #{tpu_custom_call.1} parent=27 // pred_check_branch
        %183 = sbr.rel (%p181) target = $region32
      $region31: #{tpu_custom_call.1} parent=27 // pred_region
        %s184 = smul.u32 8, %s12
        %p185 = scmp.lt.s32.totalorder %s184, 15
        %s186 = scalar_select %p185, %s184, 15
        %s187 = smul.addr %s186, 8
        %s188 = scalar_lea.vmem %s0, %s187
        %s189 = smul.u32 8, %s12
      $region32: #{tpu_custom_call.1} parent=27 // pred_fallthru
        _
    $region28: #{tpu_custom_call.1} parent=5 // pred_fallthru
      _
    %p190 = scmp.le.s32.totalorder 1, %s12
    %p191 = scmp.lt.s32.totalorder %s12, 3
    %p192 = pnand %p190, %p191
    %p193 = pneg %p192
    // Predicated region
    $region33: #{tpu_custom_call.1} parent=5 // pred_check
      _
    $region34: #{tpu_custom_call.1} parent=5 // pred_check_branch
      %195 = sbr.rel (%p192) target = $region36
    $region35: #{tpu_custom_call.1} parent=5 // pred_region
      %s196 = ssub.s32 %s12, 1
      %s197 = smul.u32 8, %s17
      %p198 = scmp.lt.s32.totalorder %s197, 15
      %s199 = scalar_select %p198, %s197, 15
      %s200 = smul.addr %s199, 8
      %s201 = scalar_lea.vmem %s0, %s200
      %p202 = pneg %p38
      %p203 = pneg %p35
      %p204 = pneg %p59
      %p205 = pneg %p56
      %p206 = pneg %p80
      %p207 = pneg %p77
      %p208 = pneg %p101
      %p209 = pneg %p98
      %p210 = pneg %p127
      %p211 = pneg %p124
      %s212 = smul.u32 8, %s17
      %p213 = scmp.lt.s32.totalorder %s212, 15
      %s214 = scalar_select %p213, %s212, 15
      %s215 = smul.addr %s214, 4
      %s216 = scalar_lea.vmem %s4, %s215
      %p217 = pneg %p153
      %p218 = pneg %p150
      %s219 = smul.u32 8, %s17
      %p220 = scmp.lt.s32.totalorder %s219, 15
      %s221 = scalar_select %p220, %s219, 15
      %s222 = smul.addr %s221, 8
      %s223 = scalar_lea.vmem %s5, %s222
      %s224 = smul.u32 8, %s17
      %p225 = scmp.lt.s32.totalorder %s224, 15
      %s226 = scalar_select %p225, %s224, 15
      %s227 = smul.addr %s226, 8
      %s228 = scalar_lea.vmem %s0, %s227
      %s229 = smul.u32 8, %s17
      %s230 = smul.u32 8, %s17
      %p231 = scmp.lt.s32.totalorder %s230, 15
      %s232 = scalar_select %p231, %s230, 15
      %s233 = smul.addr %s232, 4
      %s234 = scalar_lea.vmem %s4, %s233
      %s235 = smul.u32 8, %s17
      %s236 = smul.u32 8, %s17
      %p237 = scmp.lt.s32.totalorder %s236, 15
      %s238 = scalar_select %p237, %s236, 15
      %s239 = smul.addr %s238, 8
      %s240 = scalar_lea.vmem %s5, %s239
      %s241 = smul.u32 8, %s17
      %v243 = vld [vmem:[%s228] sm:$0xff]
      %v244 = vld [vmem:[%s228 + $0x8] sm:$0xff]
      %v245 = vld [vmem:[%s228 + $0x10] sm:$0xff]
      %v246 = vld [vmem:[%s228 + $0x18] sm:$0xff]
      %v247 = vld [vmem:[%s228 + $0x20] sm:$0xff]
      %v248 = vld [vmem:[%s228 + $0x28] sm:$0xff]
      %v249 = vld [vmem:[%s228 + $0x30] sm:$0xff]
      %v250 = vld [vmem:[%s228 + $0x38] sm:$0xff]
      %v251 = vpack.c.bf16 %v244, %v243
      %v252 = vpack.c.bf16 %v246, %v245
      %v253 = vpack.c.bf16 %v248, %v247
      %v254 = vpack.c.bf16 %v250, %v249
      %v255 = vld [vmem:[%s1] sm:$0x3]
      %vm256 = vcmask 31744
      %v258 = vsel %vm256, %v251, 0
      %v261 = vsel %vm256, %v252, 0
      %v264 = vsel %vm256, %v253, 0
      %v267 = vsel %vm256, %v254, 0
      %vm269 = vcmask 1041408
      %v271 = vsel %vm269, %v255, 0
      %273 = vmatprep.subr.bf16.mxu0 0
      %274 = vmatpush1.bf16.msra.mxu0 %v271
      %275 = vmatprep.subr.bf16.mxu0 0
      %276 = vmatpush1.bf16.msra.mxu0 0
      %277 = vmatprep.subr.bf16.mxu0 0
      %278 = vmatpush1.bf16.msra.mxu0 0
      %279 = vmatprep.subr.bf16.mxu0 0
      %280 = vmatpush1.bf16.msra.mxu0 0
      %281 = vmatprep.subr.bf16.mxu0 0
      %282 = vmatpush1.bf16.msra.mxu0 0
      %283 = vmatprep.subr.bf16.mxu0 0
      %284 = vmatpush1.bf16.msra.mxu0 0
      %285 = vmatprep.subr.bf16.mxu0 0
      %286 = vmatpush1.bf16.msra.mxu0 0
      %287 = vmatprep.subr.bf16.mxu0 0
      %288 = vmatpush1.bf16.msra.mxu0 0
      %289 = vmatprep.subr.bf16.mxu0 0
      %290 = vmatpush1.bf16.msra.mxu0 0
      %291 = vmatprep.subr.bf16.mxu0 0
      %292 = vmatpush1.bf16.msra.mxu0 0
      %293 = vmatprep.subr.bf16.mxu0 0
      %294 = vmatpush1.bf16.msra.mxu0 0
      %295 = vmatprep.subr.bf16.mxu0 0
      %296 = vmatpush1.bf16.msra.mxu0 0
      %297 = vmatprep.subr.bf16.mxu0 0
      %298 = vmatpush1.bf16.msra.mxu0 0
      %299 = vmatprep.subr.bf16.mxu0 0
      %300 = vmatpush1.bf16.msra.mxu0 0
      %301 = vmatprep.subr.bf16.mxu0 0
      %302 = vmatpush1.bf16.msra.mxu0 0
      %303 = vmatprep.subr.bf16.mxu0 0
      %304 = vmatpush1.bf16.msra.mxu0 0
      %305 = vmatprep.mubr.bf16.mxu0 0
      %306 = vmatmul.mubr.bf16.gmra.mrb[0].mxu0 %v258
      %v307 = vpop.f32.mrb[0].mxu0
      %v308 = vadd.f32 0.0, %v307
      %v309 = vpop.f32.mrb[0].mxu0
      %v310 = vpop.f32.mrb[0].mxu0
      %v311 = vadd.f32 0.0, %v310
      %v312 = vpop.f32.mrb[0].mxu0
      %313 = vmatprep.mubr.bf16.mxu0 0
      %314 = vmatmul.mubr.bf16.gmra.mrb[0].mxu0 %v261
      %v315 = vpop.f32.mrb[0].mxu0
      %v316 = vadd.f32 0.0, %v315
      %v317 = vpop.f32.mrb[0].mxu0
      %v318 = vpop.f32.mrb[0].mxu0
      %v319 = vadd.f32 0.0, %v318
      %v320 = vpop.f32.mrb[0].mxu0
      %321 = vmatprep.mubr.bf16.mxu0 0
      %322 = vmatmul.mubr.bf16.gmra.mrb[0].mxu0 %v264
      %v323 = vpop.f32.mrb[0].mxu0
      %v324 = vadd.f32 0.0, %v323
      %v325 = vpop.f32.mrb[0].mxu0
      %v326 = vpop.f32.mrb[0].mxu0
      %v327 = vadd.f32 0.0, %v326
      %v328 = vpop.f32.mrb[0].mxu0
      %329 = vmatprep.mubr.bf16.mxu0 0
      %330 = vmatmul.mubr.bf16.gmra.mrb[0].mxu0 %v267
      %v331 = vpop.f32.mrb[0].mxu0
      %v332 = vadd.f32 0.0, %v331
      %v333 = vpop.f32.mrb[0].mxu0
      %v334 = vpop.f32.mrb[0].mxu0
      %v335 = vadd.f32 0.0, %v334
      %v336 = vpop.f32.mrb[0].mxu0
      %337 = vdwg.mxu0
      %v338 = vld [vmem:[%s2] sm:$0x3]
      %v339 = vpack.c.bf16 %v311, %v308
      %v340 = vpack.c.bf16 %v319, %v316
      %v341 = vpack.c.bf16 %v327, %v324
      %v342 = vpack.c.bf16 %v335, %v332
      %v347 = vunpack.c.l.b16 %v339
      %v348 = vunpack.c.h.b16 %v339
      %v349 = vunpack.c.l.b16 %v340
      %v350 = vunpack.c.h.b16 %v340
      %v351 = vunpack.c.l.b16 %v341
      %v352 = vunpack.c.h.b16 %v341
      %v353 = vunpack.c.l.b16 %v342
      %v354 = vunpack.c.h.b16 %v342
      %v355 = vpack.c.b16 %v347, %v347
      %v356 = vpack.c.b16 %v348, %v348
      %v357 = vpack.c.b16 %v349, %v349
      %v358 = vpack.c.b16 %v350, %v350
      %v359 = vpack.c.b16 %v351, %v351
      %v360 = vpack.c.b16 %v352, %v352
      %v361 = vpack.c.b16 %v353, %v353
      %v362 = vpack.c.b16 %v354, %v354
      %vm371 = vcmask 257024
      %372 = vst.msk [vmem:[%s234] sm:$0xf] %vm371, %v355
      %373 = vst.msk [vmem:[%s234 + $0x4] sm:$0xf] %vm371, %v356
      %374 = vst.msk [vmem:[%s234 + $0x8] sm:$0xf] %vm371, %v357
      %375 = vst.msk [vmem:[%s234 + $0xc] sm:$0xf] %vm371, %v358
      %376 = vst.msk [vmem:[%s234 + $0x10] sm:$0xf] %vm371, %v359
      %377 = vst.msk [vmem:[%s234 + $0x14] sm:$0xf] %vm371, %v360
      %378 = vst.msk [vmem:[%s234 + $0x18] sm:$0xf] %vm371, %v361
      %379 = vst.msk [vmem:[%s234 + $0x1c] sm:$0xf] %vm371, %v362
      %v380 = vld [vmem:[%s3] sm:$0x1]
      %v382 = vlaneseq
      %v383 = vshrl.u32 %v382, 7
      %v384 = vsub.s32 0, %v383
      %v385 = vrot.slane %v380, %v384
      %v388 = vsel %vm269, %v338, 0
      %390 = vmatprep.subr.bf16.mxu0 0
      %391 = vmatpush1.bf16.msra.mxu0 %v388
      %392 = vmatprep.subr.bf16.mxu0 0
      %393 = vmatpush1.bf16.msra.mxu0 0
      %394 = vmatprep.subr.bf16.mxu0 0
      %395 = vmatpush1.bf16.msra.mxu0 0
      %396 = vmatprep.subr.bf16.mxu0 0
      %397 = vmatpush1.bf16.msra.mxu0 0
      %398 = vmatprep.subr.bf16.mxu0 0
      %399 = vmatpush1.bf16.msra.mxu0 0
      %400 = vmatprep.subr.bf16.mxu0 0
      %401 = vmatpush1.bf16.msra.mxu0 0
      %402 = vmatprep.subr.bf16.mxu0 0
      %403 = vmatpush1.bf16.msra.mxu0 0
      %404 = vmatprep.subr.bf16.mxu0 0
      %405 = vmatpush1.bf16.msra.mxu0 0
      %406 = vmatprep.subr.bf16.mxu0 0
      %407 = vmatpush1.bf16.msra.mxu0 0
      %408 = vmatprep.subr.bf16.mxu0 0
      %409 = vmatpush1.bf16.msra.mxu0 0
      %410 = vmatprep.subr.bf16.mxu0 0
      %411 = vmatpush1.bf16.msra.mxu0 0
      %412 = vmatprep.subr.bf16.mxu0 0
      %413 = vmatpush1.bf16.msra.mxu0 0
      %414 = vmatprep.subr.bf16.mxu0 0
      %415 = vmatpush1.bf16.msra.mxu0 0
      %416 = vmatprep.subr.bf16.mxu0 0
      %417 = vmatpush1.bf16.msra.mxu0 0
      %418 = vmatprep.subr.bf16.mxu0 0
      %419 = vmatpush1.bf16.msra.mxu0 0
      %420 = vmatprep.subr.bf16.mxu0 0
      %421 = vmatpush1.bf16.msra.mxu0 0
      %422 = vmatprep.mubr.bf16.mxu0 0
      %423 = vmatmul.mubr.bf16.gmra.mrb[0].mxu0 %v258
      %v424 = vpop.f32.mrb[0].mxu0
      %v425 = vadd.f32 %v385, %v424
      %v426 = vpop.f32.mrb[0].mxu0
      %v427 = vpop.f32.mrb[0].mxu0
      %v428 = vadd.f32 %v385, %v427
      %v429 = vpop.f32.mrb[0].mxu0
      %430 = vmatprep.mubr.bf16.mxu0 0
      %431 = vmatmul.mubr.bf16.gmra.mrb[0].mxu0 %v261
      %v432 = vpop.f32.mrb[0].mxu0
      %v433 = vadd.f32 %v385, %v432
      %v434 = vpop.f32.mrb[0].mxu0
      %v435 = vpop.f32.mrb[0].mxu0
      %v436 = vadd.f32 %v385, %v435
      %v437 = vpop.f32.mrb[0].mxu0
      %438 = vmatprep.mubr.bf16.mxu0 0
      %439 = vmatmul.mubr.bf16.gmra.mrb[0].mxu0 %v264
      %v440 = vpop.f32.mrb[0].mxu0
      %v441 = vadd.f32 %v385, %v440
      %v442 = vpop.f32.mrb[0].mxu0
      %v443 = vpop.f32.mrb[0].mxu0
      %v444 = vadd.f32 %v385, %v443
      %v445 = vpop.f32.mrb[0].mxu0
      %446 = vmatprep.mubr.bf16.mxu0 0
      %447 = vmatmul.mubr.bf16.gmra.mrb[0].mxu0 %v267
      %v448 = vpop.f32.mrb[0].mxu0
      %v449 = vadd.f32 %v385, %v448
      %v450 = vpop.f32.mrb[0].mxu0
      %v451 = vpop.f32.mrb[0].mxu0
      %v452 = vadd.f32 %v385, %v451
      %v453 = vpop.f32.mrb[0].mxu0
      %454 = vdwg.mxu0
      %vm455 = vcmask 261120
      %456 = vst.msk [vmem:[%s240] sm:$0xff] %vm455, %v425
      %457 = vst.msk [vmem:[%s240 + $0x8] sm:$0xff] %vm455, %v428
      %458 = vst.msk [vmem:[%s240 + $0x10] sm:$0xff] %vm455, %v433
      %459 = vst.msk [vmem:[%s240 + $0x18] sm:$0xff] %vm455, %v436
      %460 = vst.msk [vmem:[%s240 + $0x20] sm:$0xff] %vm455, %v441
      %461 = vst.msk [vmem:[%s240 + $0x28] sm:$0xff] %vm455, %v444
      %462 = vst.msk [vmem:[%s240 + $0x30] sm:$0xff] %vm455, %v449
      %463 = vst.msk [vmem:[%s240 + $0x38] sm:$0xff] %vm455, %v452
      %s464 = smul.u32 8, %s17
      %p465 = scmp.lt.s32.totalorder %s464, 15
      %s466 = scalar_select %p465, %s464, 15
      %s467 = smul.addr %s466, 4
      %s468 = scalar_lea.vmem %s4, %s467
      %s469 = smul.u32 8, %s17
      %p470 = scmp.lt.s32.totalorder %s469, 15
      %s471 = scalar_select %p470, %s469, 15
      %s472 = smul.addr %s471, 8
      %s473 = scalar_lea.vmem %s5, %s472
      // Predicated region
      $region37: #{tpu_custom_call.1} parent=35 // pred_check
        %p474 = pneg %p124
      $region38: #{tpu_custom_call.1} parent=35 // pred_check_branch
        %476 = sbr.rel (%p474) target = $region40
      $region39: #{tpu_custom_call.1} parent=35 // pred_region
        %s477 = smul.u32 8, %s17
      $region40: #{tpu_custom_call.1} parent=35 // pred_fallthru
        _
      // Predicated region
      $region41: #{tpu_custom_call.1} parent=35 // pred_check
        %p478 = pneg %p150
      $region42: #{tpu_custom_call.1} parent=35 // pred_check_branch
        %480 = sbr.rel (%p478) target = $region44
      $region43: #{tpu_custom_call.1} parent=35 // pred_region
        %s481 = smul.u32 8, %s17
      $region44: #{tpu_custom_call.1} parent=35 // pred_fallthru
        _
    $region36: #{tpu_custom_call.1} parent=5 // pred_fallthru
      _
    %p482 = scmp.le.s32.totalorder 2, %s12
    // Predicated region
    $region45: #{tpu_custom_call.1} parent=5 // pred_check
      %p483 = pneg %p482
    $region46: #{tpu_custom_call.1} parent=5 // pred_check_branch
      %485 = sbr.rel (%p483) target = $region48
    $region47: #{tpu_custom_call.1} parent=5 // pred_region
      %s486 = ssub.s32 %s12, 2
      // Predicated region
      $region49: #{tpu_custom_call.1} parent=47 // pred_check
        %p487 = pneg %p130
      $region50: #{tpu_custom_call.1} parent=47 // pred_check_branch
        %489 = sbr.rel (%p487) target = $region52
      $region51: #{tpu_custom_call.1} parent=47 // pred_region
        %s490 = smul.u32 8, %s18
        %p491 = scmp.lt.s32.totalorder %s490, 15
        %s492 = scalar_select %p491, %s490, 15
        %s493 = smul.addr %s492, 4
        %s494 = scalar_lea.vmem %s4, %s493
      $region52: #{tpu_custom_call.1} parent=47 // pred_fallthru
        _
      // Predicated region
      $region53: #{tpu_custom_call.1} parent=47 // pred_check
        %p495 = pneg %p156
      $region54: #{tpu_custom_call.1} parent=47 // pred_check_branch
        %497 = sbr.rel (%p495) target = $region56
      $region55: #{tpu_custom_call.1} parent=47 // pred_region
        %s498 = smul.u32 8, %s18
        %p499 = scmp.lt.s32.totalorder %s498, 15
        %s500 = scalar_select %p499, %s498, 15
        %s501 = smul.addr %s500, 8
        %s502 = scalar_lea.vmem %s5, %s501
      $region56: #{tpu_custom_call.1} parent=47 // pred_fallthru
        _
    $region48: #{tpu_custom_call.1} parent=5 // pred_fallthru
      _
  $region6: #{tpu_custom_call.1} parent=0 // loop_footer
    %s16 = sadd.s32 1, %s12
  $region7: #{tpu_custom_call.1} parent=0 // loop_footer_branch
    %11 = sbr.rel target = $region3
  $region8: #{tpu_custom_call.1} parent=0 // loop_exit
    _

</llo_original>
